<compile_context>
chip_gen: v7x
topology: tpu7x:2x2x1
jax: 0.10.0
libtpu: 0.0.40
codegen_flags: <defaults>
</compile_context>

<pallas_src>
import functools

import jax
import jax.numpy as jnp
from jax.experimental import pallas as pl
from jax.experimental.pallas import tpu as pltpu


_LANE = 128                          # TPU lane width
_MAX_BLOCK_COLS = 1024               # full-width column block up to this size
_MAX_BLOCK_BYTES = 8 * 1024 * 1024   # per-buffer VMEM tile (8 MiB)
_TARGET_GRID_STEPS = 8               # keep the DMA pipeline busy at mid sizes
_SUBLANE_ALIGN = 32                  # covers f32 (8), bf16 (16), int8/fp8 (32)
_VMEM_LIMIT_BYTES = 48 * 1024 * 1024  # 4 x 8 MiB double-buffered tiles + slack
_MIN_PALLAS_ELEMENTS = 512 * 1024    # below ~2 MiB, fused XLA is already roofline


def _round_up(x: int, m: int) -> int:
    return pl.cdiv(x, m) * m


def _gaussian_body(mu, coef, x_ref, o_ref):
    # Upcast to f32 regardless of storage dtype: free for this memory-bound
    # kernel and keeps bf16 inputs close to the fp32 PyTorch module.
    x = x_ref[...].astype(jnp.float32)
    d = x - mu
    # coef = -0.5 / sigma^2 folded at trace time -> exp(coef * d^2).
    o_ref[...] = jnp.exp(coef * d * d).astype(o_ref.dtype)


def _gaussian_pallas_2d(x2d: jax.Array, mu: float, coef: float) -> jax.Array:
    """Tiled, lane-dense Pallas path over a 2D view (R, C)."""
    R, C = x2d.shape
    itemsize = x2d.dtype.itemsize

    # ---- column blocking ---------------------------------------------------
    if C <= _MAX_BLOCK_COLS:
        block_cols = C                     # full extent: always a legal block dim
    else:
        block_cols = _MAX_BLOCK_COLS       # multiple of 128; edge block masked
    grid_cols = pl.cdiv(C, block_cols)

    # ---- row blocking --------------------------------------------------------
    # Big enough to amortize the ~0.35 us per-step pipeline overhead, small
    # enough for VMEM (<= 8 MiB / buffer), and at least ~8 total grid steps so
    # DMA-in / compute / DMA-out overlap even for mid-size inputs.
    max_block_rows = max(
        _SUBLANE_ALIGN,
        (_MAX_BLOCK_BYTES // (block_cols * itemsize))
        // _SUBLANE_ALIGN * _SUBLANE_ALIGN,
    )
    if R <= _SUBLANE_ALIGN:
        block_rows = R                     # full extent: always legal
    else:
        row_steps = max(1, pl.cdiv(_TARGET_GRID_STEPS, grid_cols))
        block_rows = _round_up(pl.cdiv(R, row_steps), _SUBLANE_ALIGN)
        block_rows = min(block_rows, max_block_rows)
        if block_rows >= R:
            block_rows = R                 # single full-extent row block
    grid_rows = pl.cdiv(R, block_rows)

    # NOTE: grid * block may exceed (R, C); Pallas masks the partial edge
    # blocks (garbage padding on input reads, out-of-bounds stores dropped),
    # which preserves exactly the old pad-then-slice semantics with zero extra
    # HBM traffic.
    return pl.pallas_call(
        functools.partial(_gaussian_body, mu, coef),
        out_shape=jax.ShapeDtypeStruct((R, C), x2d.dtype),
        grid_spec=pltpu.PrefetchScalarGridSpec(
            num_scalar_prefetch=0,
            grid=(grid_rows, grid_cols),
            in_specs=[pl.BlockSpec((block_rows, block_cols), lambda i, j: (i, j))],
            out_specs=pl.BlockSpec((block_rows, block_cols), lambda i, j: (i, j)),
        ),
        compiler_params=pltpu.CompilerParams(
            # Independent tiles on both axes. TODO(synk): use CORE_PARALLEL on
            # the row axis for v7x's two TensorCores (see header comment).
            dimension_semantics=("parallel", "parallel"),
            vmem_limit_bytes=_VMEM_LIMIT_BYTES,
        ),
    )(x2d)


def _gaussian_xla(x: jax.Array, mu: float, coef: float) -> jax.Array:
    """Fused XLA elementwise path (already at the HBM roofline for this op)."""
    xf = x.astype(jnp.float32)
    d = xf - mu
    return jnp.exp(coef * d * d).astype(x.dtype)


def gaussian_kernel(
    x: jax.Array,
    mu: float = 1.0,
    sigma: float = 1.0,
    *,
    min_pallas_elements: int = _MIN_PALLAS_ELEMENTS,
) -> jax.Array:
    """Gaussian kernel forward: exp(-0.5 * (x - mu)^2 / sigma^2)."""
    mu = float(mu)
    coef = float(-0.5 / (float(sigma) * float(sigma)))  # folded at trace time
    n = x.size

    # Small inputs: pallas_call launch + per-step overhead dominates; the
    # fused XLA expression is already bandwidth-optimal.
    if n == 0 or n < min_pallas_elements:
        return _gaussian_xla(x, mu, coef)

    # (1) Fully lane-dense flat view — free (bitcast-compatible) reshape when
    #     the element count is a multiple of 128. No pad, no slice.
    if n % _LANE == 0:
        lane_cols = _LANE
        for c in (_MAX_BLOCK_COLS, 512, 256):
            if n % c == 0:
                lane_cols = c
                break
        out2d = _gaussian_pallas_2d(x.reshape(n // lane_cols, lane_cols), mu, coef)
        return out2d.reshape(x.shape)

    # (2) Ragged total size but lane-dense last dim: collapse the leading dims
    #     (free reshape) and let Pallas mask the partial edge blocks.
    if x.ndim >= 2 and x.shape[-1] >= _LANE:
        out2d = _gaussian_pallas_2d(x.reshape(-1, x.shape[-1]), mu, coef)
        return out2d.reshape(x.shape)

    # (3) Unaligned size with a tiny last dim: any Pallas mapping would need a
    #     whole-array pad/slice copy (extra HBM passes) or heavily masked
    #     stores; the fused XLA op is the fastest correct choice here.
    return _gaussian_xla(x, mu, coef)


def gaussian_kernel_ref(x: jax.Array, mu: float = 1.0, sigma: float = 1.0) -> jax.Array:
    """Pure-JAX reference matching the PyTorch module."""
    return jnp.exp(-0.5 * (x - mu) ** 2 / sigma ** 2)


if __name__ == "__main__":
    key = jax.random.PRNGKey(0)
    k1, k2, k3, k4, k5 = jax.random.split(key, 5)

    # 1) Module docstring example (4, 5, 10): tiny + awkward layout -> the
    #    wrapper intentionally takes the fused XLA path.
    x_small = jax.random.normal(k1, (4, 5, 10), dtype=jnp.float32)
    out_small = jax.block_until_ready(gaussian_kernel(x_small))
    assert out_small.shape == x_small.shape and out_small.dtype == x_small.dtype
    assert jnp.allclose(out_small, gaussian_kernel_ref(x_small), atol=1e-6, rtol=1e-6)

    # 2) 128-aligned element count -> fully-flat lane-dense Pallas path with a
    #    multi-step pipelined grid (forced past the size threshold).
    x_flat = jax.random.normal(k2, (2, 256, 512), dtype=jnp.float32)
    out_flat = jax.block_until_ready(
        gaussian_kernel(x_flat, mu=0.5, sigma=0.3, min_pallas_elements=0))
    assert out_flat.shape == x_flat.shape and out_flat.dtype == x_flat.dtype
    assert jnp.allclose(out_flat, gaussian_kernel_ref(x_flat, 0.5, 0.3),
                        atol=1e-5, rtol=1e-5)

    # 3) Unaligned total size, lane-dense last dim -> (R, C) Pallas path with a
    #    partial row edge block (no pad / no slice copies).
    x_rag = jax.random.normal(k3, (2, 65, 257), dtype=jnp.float32)
    out_rag = jax.block_until_ready(
        gaussian_kernel(x_rag, mu=-0.25, sigma=2.0, min_pallas_elements=0))
    assert out_rag.shape == x_rag.shape and out_rag.dtype == x_rag.dtype
    assert jnp.allclose(out_rag, gaussian_kernel_ref(x_rag, -0.25, 2.0),
                        atol=1e-6, rtol=1e-6)

    # 4) Wide unaligned last dim -> column-blocked grid with a masked partial
    #    column edge block.
    x_wide = jax.random.normal(k4, (3, 5, 1500), dtype=jnp.float32)
    out_wide = jax.block_until_ready(
        gaussian_kernel(x_wide, mu=2.0, sigma=0.7, min_pallas_elements=0))
    assert out_wide.shape == x_wide.shape and out_wide.dtype == x_wide.dtype
    assert jnp.allclose(out_wide, gaussian_kernel_ref(x_wide, 2.0, 0.7),
                        atol=1e-5, rtol=1e-5)

    # 5) bf16 storage: kernel upcasts to f32 internally, casts back on store.
    x_bf = jax.random.normal(k5, (2, 128, 512), dtype=jnp.bfloat16)
    out_bf = jax.block_until_ready(
        gaussian_kernel(x_bf, mu=1.0, sigma=1.0, min_pallas_elements=0))
    ref_bf = gaussian_kernel_ref(x_bf.astype(jnp.float32), 1.0, 1.0)
    assert out_bf.shape == x_bf.shape and out_bf.dtype == jnp.bfloat16
    assert jnp.allclose(out_bf.astype(jnp.float32), ref_bf, atol=2e-2, rtol=2e-2)

    print("KERNEL_OK")
</pallas_src>

<mosaic_0001>
module attributes {stable_mosaic.version = 11 : i64} {
  func.func @_gaussian_body(%arg0: i32, %arg1: i32, %arg2: memref<32x1024xf32, #tpu.memory_space<vmem>>, %arg3: memref<32x1024xf32, #tpu.memory_space<vmem>>) attributes {dimension_semantics = [#tpu.dimension_semantics<parallel>, #tpu.dimension_semantics<parallel>], iteration_bounds = array<i64: 8, 1>, scalar_prefetch = 0 : i64, scratch_operands = 0 : i64, tpu.core_type = #tpu.core_type<tc>, window_params = [{transform_indices = @transform_0, window_bounds = array<i64: 32, 1024>}, {transform_indices = @transform_1, window_bounds = array<i64: 32, 1024>}]} {
    %c0 = arith.constant 0 : index
    %c0_0 = arith.constant 0 : index
    %0 = vector.load %arg2[%c0, %c0_0] : memref<32x1024xf32, #tpu.memory_space<vmem>>, vector<32x1024xf32>
    %cst = arith.constant 5.000000e-01 : f32
    %1 = vector.broadcast %cst : f32 to vector<32x1024xf32>
    %2 = arith.subf %0, %1 : vector<32x1024xf32>
    %cst_1 = arith.constant -5.55555534 : f32
    %3 = vector.broadcast %cst_1 : f32 to vector<32x1024xf32>
    %4 = arith.mulf %3, %2 : vector<32x1024xf32>
    %5 = arith.mulf %4, %2 : vector<32x1024xf32>
    %6 = math.exp %5 : vector<32x1024xf32>
    %c0_2 = arith.constant 0 : index
    %c0_3 = arith.constant 0 : index
    %7 = vector.load %arg3[%c0_2, %c0_3] : memref<32x1024xf32, #tpu.memory_space<vmem>>, vector<32x1024xf32>
    tpu.vector_store %arg3[%c0_2, %c0_3], %6 {strides = array<i32>} : memref<32x1024xf32, #tpu.memory_space<vmem>>, vector<32x1024xf32>,
    return
  }
  func.func @transform_0(%arg0: i32, %arg1: i32) -> (i32, i32) {
    %c0_i32 = arith.constant 0 : i32
    return %arg0, %arg1 : i32, i32
  }
  func.func @transform_1(%arg0: i32, %arg1: i32) -> (i32, i32) {
    %c0_i32 = arith.constant 0 : i32
    return %arg0, %arg1 : i32, i32
  }
}

</mosaic_0001>

<llo_original>
// kernel: tpu_custom_call.1
$region0: #{tpu_custom_call.1}
  #allocation0 [shape = 'u32[]', space=smem, size = 0x4, offset = 0x4, fixed_abs, tag = 'smem constant byte address 0x4 - core index']
  #allocation1 [shape = 'u32[144,128]{1,0:T(1,128)}', space=vmem, size = 0x12000, scoped, tag = 'internal scratch']
  %s0 = inlined_call_operand.hbm [shape: f32[256,1024], index: 0, kind: input, shape index: {}]
  %s1 = inlined_call_operand.hbm [shape: f32[256,1024], index: 1, kind: output, shape index: {}]
  %s2 = sld [smem:[#allocation0]]
  $region41: #{tpu_custom_call.1} parent=0
    _
  %s4 = ssub.s32 1, %s2
  %s5 = scalar_select 0, %s4, %s2
  $region1: #{tpu_custom_call.1} parent=0
    #allocation2 [shape = 'u8[262144]{0}', space=vmem, size = 0x40000, scoped, tag = 'input window, operand 0']
    #allocation3 [shape = 's32[2]{0}', space=sflag, size = 0x8, scoped, tag = 'scoped memory for tpu_custom_call.1']
    #allocation4 [shape = 's32[2]{0}', space=sflag, size = 0x8, scoped, tag = 'scoped memory for tpu_custom_call.1']
    #allocation5 [shape = 'u8[262144]{0}', space=vmem, size = 0x40000, scoped, tag = 'output window, operand 0']
    %6 = vsyncpa [#allocation3], 0
    %s7 = scalar_lea.sflag [#allocation3], 1
    %8 = vsyncpa %s7, 0
    %9 = vsyncpa [#allocation4], 0
    %s10 = scalar_lea.sflag [#allocation4], 1
    %11 = vsyncpa %s10, 0
    loop: start=0, step=1, limit=10
    $region2: #{tpu_custom_call.1} parent=1 // loop_pre_header
      _
    $region3: #{tpu_custom_call.1} parent=1 // loop_header
      %s13 = sphi 0, %s17
      %p14 = scmp.ge.s32.totalorder %s13, 10
      %s20 = sphi 0, %s32
      %s21 = sphi 0, %s28
      %s22 = sphi 0, %s20
      %s23 = sphi 0, %s21
      %s24 = sphi 0, %s22
      %s25 = sphi 0, %s23
      %s37 = sphi 0, %s39
      %s40 = sphi 0, %s37
      %s41 = sphi 0, %s40
      %s57 = sphi 0, %s41
      %s65 = sphi 0, %s67
      %s68 = sphi 0, %s65
      %s69 = sphi 0, %s68
      %s85 = sphi 0, %s69
    $region4: #{tpu_custom_call.1} parent=1 // loop_header_branch
      %16 = sbr.rel (%p14) target = $region8
    $region5: #{tpu_custom_call.1} parent=1 // loop_body
      %s18 = ssub.s32 %s13, 1
      %s19 = ssub.s32 %s13, 2
      %s26 = sadd.s32 1, %s21
      %p27 = scmp.ge.s32.totalorder %s26, 1
      %s28 = scalar_select %p27, 0, %s26
      %s29 = sadd.s32 1, %s20
      %s30 = scalar_select %p27, %s29, %s20
      %p31 = scmp.ge.s32.totalorder %s30, 8
      %s32 = scalar_select %p31, 0, %s30
      %s33 = ssub.s32 %s20, %s32
      %s34 = ssub.s32 %s21, %s28
      %s35 = sor.u32 %s33, %s34
      %p36 = scmp.eq.s32.totalorder %s35, 0
      %s38 = sadd.s32 %s37, 1
      %s39 = scalar_select %p36, %s37, %s38
      %p42 = pneg %p36
      %p43 = scmp.eq.s32.totalorder %s13, 7
      %p44 = por %p42, %p43
      %p45 = scmp.ne.s32.totalorder %s37, %s40
      %p46 = scmp.eq.s32.totalorder %s13, 0
      %p47 = por %p45, %p46
      %p48 = scmp.ne.s32.totalorder %s37, %s40
      %p49 = scmp.eq.s32.totalorder %s18, 7
      %p50 = por %p48, %p49
      %p51 = scmp.ne.s32.totalorder %s40, %s41
      %p52 = scmp.eq.s32.totalorder %s18, 0
      %p53 = por %p51, %p52
      %p54 = scmp.ne.s32.totalorder %s40, %s41
      %p55 = scmp.eq.s32.totalorder %s19, 7
      %p56 = por %p54, %p55
      %p58 = scmp.ne.s32.totalorder %s41, %s57
      %p59 = scmp.eq.s32.totalorder %s19, 0
      %p60 = por %p58, %p59
      %s61 = ssub.s32 %s20, %s32
      %s62 = ssub.s32 %s21, %s28
      %s63 = sor.u32 %s61, %s62
      %p64 = scmp.eq.s32.totalorder %s63, 0
      %s66 = sadd.s32 %s65, 1
      %s67 = scalar_select %p64, %s65, %s66
      %p70 = pneg %p64
      %p71 = scmp.eq.s32.totalorder %s13, 7
      %p72 = por %p70, %p71
      %p73 = scmp.ne.s32.totalorder %s65, %s68
      %p74 = scmp.eq.s32.totalorder %s13, 0
      %p75 = por %p73, %p74
      %p76 = scmp.ne.s32.totalorder %s65, %s68
      %p77 = scmp.eq.s32.totalorder %s18, 7
      %p78 = por %p76, %p77
      %p79 = scmp.ne.s32.totalorder %s68, %s69
      %p80 = scmp.eq.s32.totalorder %s18, 0
      %p81 = por %p79, %p80
      %p82 = scmp.ne.s32.totalorder %s68, %s69
      %p83 = scmp.eq.s32.totalorder %s19, 7
      %p84 = por %p82, %p83
      %p86 = scmp.ne.s32.totalorder %s69, %s85
      %p87 = scmp.eq.s32.totalorder %s19, 0
      %p88 = por %p86, %p87
      %p89 = scmp.le.s32.totalorder 1, %s13
      %p90 = scmp.lt.s32.totalorder %s13, 9
      %p91 = pnand %p89, %p90
      %p92 = pneg %p91
      // Predicated region
      $region9: #{tpu_custom_call.1} parent=5 // pred_check
        _
      $region10: #{tpu_custom_call.1} parent=5 // pred_check_branch
        %94 = sbr.rel (%p91) target = $region12
      $region11: #{tpu_custom_call.1} parent=5 // pred_region
        %s95 = ssub.s32 %s13, 1
      $region12: #{tpu_custom_call.1} parent=5 // pred_fallthru
        _
      %p96 = scmp.lt.s32.totalorder %s13, 8
      // Predicated region
      $region13: #{tpu_custom_call.1} parent=5 // pred_check
        %p97 = pneg %p96
      $region14: #{tpu_custom_call.1} parent=5 // pred_check_branch
        %99 = sbr.rel (%p97) target = $region16
      $region15: #{tpu_custom_call.1} parent=5 // pred_region
        // Predicated region
        $region17: #{tpu_custom_call.1} parent=15 // pred_check
          %p100 = pneg %p47
        $region18: #{tpu_custom_call.1} parent=15 // pred_check_branch
          %102 = sbr.rel (%p100) target = $region20
        $region19: #{tpu_custom_call.1} parent=15 // pred_region
          %s103 = sand.u32 %s37, 1
          %s104 = scalar_lea.sflag [#allocation3], %s103
          %s105 = sand.u32 %s37, 1
          %s106 = smul.addr %s105, 256
          %s107 = scalar_lea.vmem [#allocation2], %s106
          %s108 = smul.u32 4, %s20
          %s109 = smul.u32 8, %s21
          %s111 = ssub.s32 4096, 4096
          %112 = vsyncadd %s104, %s111
          %s113 = smul.addr %s108, 8
          %s114 = sadd.s32 %s109, %s113
          %s115 = smul.addr %s114, 128
          %s116 = scalar_lea.hbm %s0, %s115
          %s117 = sshll.u32 %s107, 4
          %s118 = int_to_ptr.vmem [resolvable:$true] %s117
          %123 = dma.hbm_to_vmem [thread:$0]  %s116, 4096, %s118, %s104, 1024, 1024, 64
        $region20: #{tpu_custom_call.1} parent=15 // pred_fallthru
          _
      $region16: #{tpu_custom_call.1} parent=5 // pred_fallthru
        _
      %p124 = scmp.le.s32.totalorder 1, %s13
      %p125 = scmp.lt.s32.totalorder %s13, 9
      %p126 = pnand %p124, %p125
      %p127 = pneg %p126
      // Predicated region
      $region21: #{tpu_custom_call.1} parent=5 // pred_check
        _
      $region22: #{tpu_custom_call.1} parent=5 // pred_check_branch
        %129 = sbr.rel (%p126) target = $region24
      $region23: #{tpu_custom_call.1} parent=5 // pred_region
        %s130 = ssub.s32 %s13, 1
        %s131 = sand.u32 %s40, 1
        %s132 = scalar_lea.sflag [#allocation3], %s131
        %s133 = sand.u32 %s40, 1
        %s134 = smul.addr %s133, 256
        %s135 = scalar_lea.vmem [#allocation2], %s134
        // Predicated region
        $region25: #{tpu_custom_call.1} parent=23 // pred_check
          %p136 = pneg %p53
        $region26: #{tpu_custom_call.1} parent=23 // pred_check_branch
          %138 = sbr.rel (%p136) target = $region28
        $region27: #{tpu_custom_call.1} parent=23 // pred_region
          %139 = dma.done %s132, 4096
        $region28: #{tpu_custom_call.1} parent=23 // pred_fallthru
          _
        %s140 = sand.u32 %s40, 1
        %s141 = scalar_lea.sflag [#allocation3], %s140
        %s142 = sand.u32 %s40, 1
        %s143 = smul.addr %s142, 256
        %s144 = scalar_lea.vmem [#allocation2], %s143
        %p145 = pneg %p53
        %p146 = pneg %p50
        %p147 = pneg %p81
        %p148 = pneg %p78
        %s149 = sand.u32 %s68, 1
        %s150 = scalar_lea.sflag [#allocation4], %s149
        %s151 = sand.u32 %s68, 1
        %s152 = smul.addr %s151, 256
        %s153 = scalar_lea.vmem [#allocation5], %s152
        %s154 = smul.u32 4, %s22
        %s155 = smul.u32 8, %s23
        %s156 = smul.u32 4, %s22
        %s157 = smul.u32 8, %s23
        %v158 = vld [vmem:[%s135] sm:$0xff]
        %v159 = vld [vmem:[%s135 + $0x8] sm:$0xff]
        %v160 = vld [vmem:[%s135 + $0x10] sm:$0xff]
        %v161 = vld [vmem:[%s135 + $0x18] sm:$0xff]
        %v162 = vld [vmem:[%s135 + $0x20] sm:$0xff]
        %v163 = vld [vmem:[%s135 + $0x28] sm:$0xff]
        %v164 = vld [vmem:[%s135 + $0x30] sm:$0xff]
        %v165 = vld [vmem:[%s135 + $0x38] sm:$0xff]
        %v166 = vld [vmem:[%s135 + $0x40] sm:$0xff]
        %v167 = vld [vmem:[%s135 + $0x48] sm:$0xff]
        %v168 = vld [vmem:[%s135 + $0x50] sm:$0xff]
        %v169 = vld [vmem:[%s135 + $0x58] sm:$0xff]
        %v170 = vld [vmem:[%s135 + $0x60] sm:$0xff]
        %v171 = vld [vmem:[%s135 + $0x68] sm:$0xff]
        %v172 = vld [vmem:[%s135 + $0x70] sm:$0xff]
        %v173 = vld [vmem:[%s135 + $0x78] sm:$0xff]
        %v174 = vld [vmem:[%s135 + $0x80] sm:$0xff]
        %v175 = vld [vmem:[%s135 + $0x88] sm:$0xff]
        %v176 = vld [vmem:[%s135 + $0x90] sm:$0xff]
        %v177 = vld [vmem:[%s135 + $0x98] sm:$0xff]
        %v178 = vld [vmem:[%s135 + $0xa0] sm:$0xff]
        %v179 = vld [vmem:[%s135 + $0xa8] sm:$0xff]
        %v180 = vld [vmem:[%s135 + $0xb0] sm:$0xff]
        %v181 = vld [vmem:[%s135 + $0xb8] sm:$0xff]
        %v182 = vld [vmem:[%s135 + $0xc0] sm:$0xff]
        %v183 = vld [vmem:[%s135 + $0xc8] sm:$0xff]
        %v184 = vld [vmem:[%s135 + $0xd0] sm:$0xff]
        %v185 = vld [vmem:[%s135 + $0xd8] sm:$0xff]
        %v186 = vld [vmem:[%s135 + $0xe0] sm:$0xff]
        %v187 = vld [vmem:[%s135 + $0xe8] sm:$0xff]
        %v188 = vld [vmem:[%s135 + $0xf0] sm:$0xff]
        %v189 = vld [vmem:[%s135 + $0xf8] sm:$0xff]
        %v190 = vsub.f32 %v158, 0.5
        %v191 = vsub.f32 %v159, 0.5
        %v192 = vsub.f32 %v160, 0.5
        %v193 = vsub.f32 %v161, 0.5
        %v194 = vsub.f32 %v162, 0.5
        %v195 = vsub.f32 %v163, 0.5
        %v196 = vsub.f32 %v164, 0.5
        %v197 = vsub.f32 %v165, 0.5
        %v198 = vsub.f32 %v166, 0.5
        %v199 = vsub.f32 %v167, 0.5
        %v200 = vsub.f32 %v168, 0.5
        %v201 = vsub.f32 %v169, 0.5
        %v202 = vsub.f32 %v170, 0.5
        %v203 = vsub.f32 %v171, 0.5
        %v204 = vsub.f32 %v172, 0.5
        %v205 = vsub.f32 %v173, 0.5
        %v206 = vsub.f32 %v174, 0.5
        %v207 = vsub.f32 %v175, 0.5
        %v208 = vsub.f32 %v176, 0.5
        %v209 = vsub.f32 %v177, 0.5
        %v210 = vsub.f32 %v178, 0.5
        %v211 = vsub.f32 %v179, 0.5
        %v212 = vsub.f32 %v180, 0.5
        %v213 = vsub.f32 %v181, 0.5
        %v214 = vsub.f32 %v182, 0.5
        %v215 = vsub.f32 %v183, 0.5
        %v216 = vsub.f32 %v184, 0.5
        %v217 = vsub.f32 %v185, 0.5
        %v218 = vsub.f32 %v186, 0.5
        %v219 = vsub.f32 %v187, 0.5
        %v220 = vsub.f32 %v188, 0.5
        %v221 = vsub.f32 %v189, 0.5
        %v222 = vmul.f32 %v190, -5.5555553
        %v223 = vmul.f32 %v191, -5.5555553
        %v224 = vmul.f32 %v192, -5.5555553
        %v225 = vmul.f32 %v193, -5.5555553
        %v226 = vmul.f32 %v194, -5.5555553
        %v227 = vmul.f32 %v195, -5.5555553
        %v228 = vmul.f32 %v196, -5.5555553
        %v229 = vmul.f32 %v197, -5.5555553
        %v230 = vmul.f32 %v198, -5.5555553
        %v231 = vmul.f32 %v199, -5.5555553
        %v232 = vmul.f32 %v200, -5.5555553
        %v233 = vmul.f32 %v201, -5.5555553
        %v234 = vmul.f32 %v202, -5.5555553
        %v235 = vmul.f32 %v203, -5.5555553
        %v236 = vmul.f32 %v204, -5.5555553
        %v237 = vmul.f32 %v205, -5.5555553
        %v238 = vmul.f32 %v206, -5.5555553
        %v239 = vmul.f32 %v207, -5.5555553
        %v240 = vmul.f32 %v208, -5.5555553
        %v241 = vmul.f32 %v209, -5.5555553
        %v242 = vmul.f32 %v210, -5.5555553
        %v243 = vmul.f32 %v211, -5.5555553
        %v244 = vmul.f32 %v212, -5.5555553
        %v245 = vmul.f32 %v213, -5.5555553
        %v246 = vmul.f32 %v214, -5.5555553
        %v247 = vmul.f32 %v215, -5.5555553
        %v248 = vmul.f32 %v216, -5.5555553
        %v249 = vmul.f32 %v217, -5.5555553
        %v250 = vmul.f32 %v218, -5.5555553
        %v251 = vmul.f32 %v219, -5.5555553
        %v252 = vmul.f32 %v220, -5.5555553
        %v253 = vmul.f32 %v221, -5.5555553
        %v254 = vmul.f32 %v222, %v190
        %v255 = vmul.f32 %v223, %v191
        %v256 = vmul.f32 %v224, %v192
        %v257 = vmul.f32 %v225, %v193
        %v258 = vmul.f32 %v226, %v194
        %v259 = vmul.f32 %v227, %v195
        %v260 = vmul.f32 %v228, %v196
        %v261 = vmul.f32 %v229, %v197
        %v262 = vmul.f32 %v230, %v198
        %v263 = vmul.f32 %v231, %v199
        %v264 = vmul.f32 %v232, %v200
        %v265 = vmul.f32 %v233, %v201
        %v266 = vmul.f32 %v234, %v202
        %v267 = vmul.f32 %v235, %v203
        %v268 = vmul.f32 %v236, %v204
        %v269 = vmul.f32 %v237, %v205
        %v270 = vmul.f32 %v238, %v206
        %v271 = vmul.f32 %v239, %v207
        %v272 = vmul.f32 %v240, %v208
        %v273 = vmul.f32 %v241, %v209
        %v274 = vmul.f32 %v242, %v210
        %v275 = vmul.f32 %v243, %v211
        %v276 = vmul.f32 %v244, %v212
        %v277 = vmul.f32 %v245, %v213
        %v278 = vmul.f32 %v246, %v214
        %v279 = vmul.f32 %v247, %v215
        %v280 = vmul.f32 %v248, %v216
        %v281 = vmul.f32 %v249, %v217
        %v282 = vmul.f32 %v250, %v218
        %v283 = vmul.f32 %v251, %v219
        %v284 = vmul.f32 %v252, %v220
        %v285 = vmul.f32 %v253, %v221
        %v286 = vmul.f32 %v254, 1.442695
        %v287 = vpow.pop %v286
        %v288 = vmul.f32 %v255, 1.442695
        %v289 = vpow.pop %v288
        %v290 = vmul.f32 %v256, 1.442695
        %v291 = vpow.pop %v290
        %v292 = vmul.f32 %v257, 1.442695
        %v293 = vpow.pop %v292
        %v294 = vmul.f32 %v258, 1.442695
        %v295 = vpow.pop %v294
        %v296 = vmul.f32 %v259, 1.442695
        %v297 = vpow.pop %v296
        %v298 = vmul.f32 %v260, 1.442695
        %v299 = vpow.pop %v298
        %v300 = vmul.f32 %v261, 1.442695
        %v301 = vpow.pop %v300
        %v302 = vmul.f32 %v262, 1.442695
        %v303 = vpow.pop %v302
        %v304 = vmul.f32 %v263, 1.442695
        %v305 = vpow.pop %v304
        %v306 = vmul.f32 %v264, 1.442695
        %v307 = vpow.pop %v306
        %v308 = vmul.f32 %v265, 1.442695
        %v309 = vpow.pop %v308
        %v310 = vmul.f32 %v266, 1.442695
        %v311 = vpow.pop %v310
        %v312 = vmul.f32 %v267, 1.442695
        %v313 = vpow.pop %v312
        %v314 = vmul.f32 %v268, 1.442695
        %v315 = vpow.pop %v314
        %v316 = vmul.f32 %v269, 1.442695
        %v317 = vpow.pop %v316
        %v318 = vmul.f32 %v270, 1.442695
        %v319 = vpow.pop %v318
        %v320 = vmul.f32 %v271, 1.442695
        %v321 = vpow.pop %v320
        %v322 = vmul.f32 %v272, 1.442695
        %v323 = vpow.pop %v322
        %v324 = vmul.f32 %v273, 1.442695
        %v325 = vpow.pop %v324
        %v326 = vmul.f32 %v274, 1.442695
        %v327 = vpow.pop %v326
        %v328 = vmul.f32 %v275, 1.442695
        %v329 = vpow.pop %v328
        %v330 = vmul.f32 %v276, 1.442695
        %v331 = vpow.pop %v330
        %v332 = vmul.f32 %v277, 1.442695
        %v333 = vpow.pop %v332
        %v334 = vmul.f32 %v278, 1.442695
        %v335 = vpow.pop %v334
        %v336 = vmul.f32 %v279, 1.442695
        %v337 = vpow.pop %v336
        %v338 = vmul.f32 %v280, 1.442695
        %v339 = vpow.pop %v338
        %v340 = vmul.f32 %v281, 1.442695
        %v341 = vpow.pop %v340
        %v342 = vmul.f32 %v282, 1.442695
        %v343 = vpow.pop %v342
        %v344 = vmul.f32 %v283, 1.442695
        %v345 = vpow.pop %v344
        %v346 = vmul.f32 %v284, 1.442695
        %v347 = vpow.pop %v346
        %v348 = vmul.f32 %v285, 1.442695
        %v349 = vpow.pop %v348
        %350 = vst [vmem:[%s153] sm:$0xff] %v287
        %351 = vst [vmem:[%s153 + $0x8] sm:$0xff] %v289
        %352 = vst [vmem:[%s153 + $0x10] sm:$0xff] %v291
        %353 = vst [vmem:[%s153 + $0x18] sm:$0xff] %v293
        %354 = vst [vmem:[%s153 + $0x20] sm:$0xff] %v295
        %355 = vst [vmem:[%s153 + $0x28] sm:$0xff] %v297
        %356 = vst [vmem:[%s153 + $0x30] sm:$0xff] %v299
        %357 = vst [vmem:[%s153 + $0x38] sm:$0xff] %v301
        %358 = vst [vmem:[%s153 + $0x40] sm:$0xff] %v303
        %359 = vst [vmem:[%s153 + $0x48] sm:$0xff] %v305
        %360 = vst [vmem:[%s153 + $0x50] sm:$0xff] %v307
        %361 = vst [vmem:[%s153 + $0x58] sm:$0xff] %v309
        %362 = vst [vmem:[%s153 + $0x60] sm:$0xff] %v311
        %363 = vst [vmem:[%s153 + $0x68] sm:$0xff] %v313
        %364 = vst [vmem:[%s153 + $0x70] sm:$0xff] %v315
        %365 = vst [vmem:[%s153 + $0x78] sm:$0xff] %v317
        %366 = vst [vmem:[%s153 + $0x80] sm:$0xff] %v319
        %367 = vst [vmem:[%s153 + $0x88] sm:$0xff] %v321
        %368 = vst [vmem:[%s153 + $0x90] sm:$0xff] %v323
        %369 = vst [vmem:[%s153 + $0x98] sm:$0xff] %v325
        %370 = vst [vmem:[%s153 + $0xa0] sm:$0xff] %v327
        %371 = vst [vmem:[%s153 + $0xa8] sm:$0xff] %v329
        %372 = vst [vmem:[%s153 + $0xb0] sm:$0xff] %v331
        %373 = vst [vmem:[%s153 + $0xb8] sm:$0xff] %v333
        %374 = vst [vmem:[%s153 + $0xc0] sm:$0xff] %v335
        %375 = vst [vmem:[%s153 + $0xc8] sm:$0xff] %v337
        %376 = vst [vmem:[%s153 + $0xd0] sm:$0xff] %v339
        %377 = vst [vmem:[%s153 + $0xd8] sm:$0xff] %v341
        %378 = vst [vmem:[%s153 + $0xe0] sm:$0xff] %v343
        %379 = vst [vmem:[%s153 + $0xe8] sm:$0xff] %v345
        %380 = vst [vmem:[%s153 + $0xf0] sm:$0xff] %v347
        %381 = vst [vmem:[%s153 + $0xf8] sm:$0xff] %v349
        %s382 = sand.u32 %s68, 1
        %s383 = scalar_lea.sflag [#allocation4], %s382
        %s384 = sand.u32 %s68, 1
        %s385 = smul.addr %s384, 256
        %s386 = scalar_lea.vmem [#allocation5], %s385
        // Predicated region
        $region29: #{tpu_custom_call.1} parent=23 // pred_check
          %p387 = pneg %p78
        $region30: #{tpu_custom_call.1} parent=23 // pred_check_branch
          %389 = sbr.rel (%p387) target = $region32
        $region31: #{tpu_custom_call.1} parent=23 // pred_region
          %s390 = smul.u32 4, %s22
          %s391 = smul.u32 8, %s23
          %s393 = ssub.s32 4096, 4096
          %394 = vsyncadd %s383, %s393
          %s395 = smul.addr %s390, 8
          %s396 = sadd.s32 %s391, %s395
          %s397 = smul.addr %s396, 128
          %s398 = scalar_lea.hbm %s1, %s397
          %s399 = sshll.u32 %s386, 4
          %s400 = int_to_ptr.vmem [resolvable:$true] %s399
          %405 = dma.vmem_to_hbm [thread:$0]  %s400, 4096, %s398, %s383, 1024, 1024, 64
        $region32: #{tpu_custom_call.1} parent=23 // pred_fallthru
          _
      $region24: #{tpu_custom_call.1} parent=5 // pred_fallthru
        _
      %p406 = scmp.le.s32.totalorder 2, %s13
      // Predicated region
      $region33: #{tpu_custom_call.1} parent=5 // pred_check
        %p407 = pneg %p406
      $region34: #{tpu_custom_call.1} parent=5 // pred_check_branch
        %409 = sbr.rel (%p407) target = $region36
      $region35: #{tpu_custom_call.1} parent=5 // pred_region
        %s410 = ssub.s32 %s13, 2
        // Predicated region
        $region37: #{tpu_custom_call.1} parent=35 // pred_check
          %p411 = pneg %p84
        $region38: #{tpu_custom_call.1} parent=35 // pred_check_branch
          %413 = sbr.rel (%p411) target = $region40
        $region39: #{tpu_custom_call.1} parent=35 // pred_region
          %s414 = sand.u32 %s69, 1
          %s415 = scalar_lea.sflag [#allocation4], %s414
          %s416 = sand.u32 %s69, 1
          %s417 = smul.addr %s416, 256
          %s418 = scalar_lea.vmem [#allocation5], %s417
          %419 = dma.done %s415, 4096
        $region40: #{tpu_custom_call.1} parent=35 // pred_fallthru
          _
      $region36: #{tpu_custom_call.1} parent=5 // pred_fallthru
        _
    $region6: #{tpu_custom_call.1} parent=1 // loop_footer
      %s17 = sadd.s32 1, %s13
    $region7: #{tpu_custom_call.1} parent=1 // loop_footer_branch
      %12 = sbr.rel target = $region3
    $region8: #{tpu_custom_call.1} parent=1 // loop_exit
      _
    %420 = vsyncpa [#allocation3], 1
    %s421 = scalar_lea.sflag [#allocation3], 1
    %422 = vsyncpa %s421, 1
    %423 = vsyncpa [#allocation4], 1
    %s424 = scalar_lea.sflag [#allocation4], 1
    %425 = vsyncpa %s424, 1

</llo_original>
